<compile_context>
chip_gen: v5e
topology: v5e:2x2
jax: 0.10.0
libtpu: 0.0.40
codegen_flags: <defaults>
</compile_context>

<pallas_src>
import jax
import jax.numpy as jnp
from jax import lax
from jax.experimental import pallas as pl
from jax.experimental.pallas import tpu as pltpu


def _lconv_kernel(x_ref, w_ref, o_ref):
    """One (batch-tile, out-column-tile) step.

    x_ref : (TB, cin*dp)   flattened input rows (input dtype)
    w_ref : (cin*dp, TN)   fused Wi-into-L weight slab (input dtype)
    o_ref : (TB, TN)       output slab
    """
    acc = jnp.dot(x_ref[...], w_ref[...], preferred_element_type=jnp.float32)
    tn = o_ref.shape[-1]
    if tn == x_ref.shape[-1]:
        res = x_ref[...]                        # single column tile: residual == whole x tile
    else:
        # Residual: output flat column o*dp+d' maps to the same x flat column
        # (cout == cin); column-tile starts are multiples of 128 (lane aligned).
        off = pl.multiple_of(pl.program_id(1) * tn, 128)
        res = x_ref[:, pl.ds(off, tn)]
    o_ref[...] = (acc + res.astype(jnp.float32)).astype(o_ref.dtype)


def _round_up(x, m):
    return ((x + m - 1) // m) * m


def _vmem_plan():
    """(tile-planning budget, scoped vmem limit) from the actual chip's VMEM."""
    try:
        cap = pltpu.get_tpu_info().vmem_capacity_bytes
    except Exception:
        cap = 64 * 1024 * 1024                       # conservative fallback (v7x-sized)
    limit = min(int(cap * 0.75), 100 * 1024 * 1024)  # ~48 MiB on v7x, ~96 MiB on v5e/v6e
    budget = min(int(cap * 0.50), 64 * 1024 * 1024)  # headroom for compiler temps
    return budget, limit


def _num_tensorcores():
    """Best-effort TensorCore count (2 on v7x megacore chips, 1 on v5e/v6e)."""
    try:
        return max(1, int(getattr(jax.local_devices()[0], "num_cores", 1)))
    except Exception:
        return 1


def lconv_core(x, L, Wi, *, batch_tile=None):
    """y[b,o,d] = sum_{k,c,f} L[k,d,f] x[b,c,f] Wi[k,o,c] + x[b,o,d]."""
    b, cin, d = x.shape
    num_L, cout, cin_w = Wi.shape
    assert L.shape == (num_L, d, d)
    assert cin_w == cin and cout == cin, "residual add requires cout == cin"

    isz = x.dtype.itemsize
    sub = max(8, 32 // isz)              # sublane tile: 8 (f32) / 16 (bf16)
    dp = _round_up(d, 128)               # lane-dense last dim
    K = cin * dp                         # contraction size of the fused matmul
    N = cout * dp                        # output columns of the fused matmul

    budget, vmem_limit = _vmem_plan()

    # ---- fused weight: W[(c,f),(o,d')] = sum_k Wi[k,o,c] * L[k,d',f] ----------
    # Built once on the host in f32 (exact fold), cast to x.dtype for the MXU.
    Lp = L if d == dp else jnp.pad(L, ((0, 0), (0, dp - d), (0, dp - d)))
    W = jnp.einsum("koc,kdf->cfod",
                   Wi.astype(jnp.float32), Lp.astype(jnp.float32),
                   precision=lax.Precision.HIGHEST)
    W = W.reshape(K, N).astype(x.dtype)

    # ---- tile selection --------------------------------------------------------
    # Out-column tile: keep the whole fused weight resident when it fits the
    # budget (double-buffer accounted); otherwise stream (K, tn) slabs over a
    # second grid axis (handles large num_L / d on v7x's 64 MiB VMEM).
    tn = N
    for m in range(cout, 0, -1):
        if cout % m:
            continue
        tn = m * dp
        if 2 * K * tn * isz <= budget // 2:
            break
    nn = N // tn

    # Batch tile: from the VMEM left over after the weight slab.
    rem = max(budget - 2 * K * tn * isz, budget // 8)
    per_row = 2 * K * isz + 2 * tn * isz + tn * 4    # x dbl-buf + out dbl-buf + f32 acc vregs
    if batch_tile is not None:
        tb = max(sub, (int(batch_tile) // sub) * sub)
    else:
        tb = max(sub, (int(rem // per_row) // sub) * sub)
        tb = min(tb, 1024, _round_up(b, sub))
        # v7x (2 TensorCores): keep two balanced, sublane-aligned batch steps when
        # the whole batch would otherwise land in a single grid step.  Single-TC
        # chips (v5e/v6e) keep the maximal tile (better MXU M fill).
        if (_num_tensorcores() >= 2 and nn == 1 and b >= 2 * sub
                and tb >= _round_up(b, sub)):
            tb = _round_up(_round_up(b, sub) // 2, sub)
    b_pad = _round_up(b, tb)
    nb = b_pad // tb

    # ---- layout plumbing (no transposes; pads only when actually needed) ------
    xf = x if d == dp else jnp.pad(x, ((0, 0), (0, 0), (0, dp - d)))
    xf = xf.reshape(b, K)
    if b_pad != b:
        xf = jnp.pad(xf, ((0, b_pad - b), (0, 0)))

    w_reads = nb if nn > 1 else 1        # weight re-streamed per batch tile only if tiled over N
    flops = 2 * b_pad * K * N + b_pad * N
    bytes_accessed = int(xf.size) * isz + int(W.size) * isz * w_reads + b_pad * N * isz

    yflat = pl.pallas_call(
        _lconv_kernel,
        out_shape=jax.ShapeDtypeStruct((b_pad, N), x.dtype),
        grid_spec=pltpu.PrefetchScalarGridSpec(
            num_scalar_prefetch=0,
            grid=(nb, nn),
            in_specs=[
                pl.BlockSpec((tb, K), lambda i, j: (i, 0)),   # x rows, resident across j
                pl.BlockSpec((K, tn), lambda i, j: (0, j)),   # fused weight slab
            ],
            out_specs=pl.BlockSpec((tb, tn), lambda i, j: (i, j)),
        ),
        compiler_params=pltpu.CompilerParams(
            dimension_semantics=("parallel", "parallel"),
            vmem_limit_bytes=vmem_limit,
        ),
        cost_estimate=pl.CostEstimate(
            flops=int(flops), transcendentals=0, bytes_accessed=int(bytes_accessed)),
    )(xf, W)

    # back to the PyTorch layout (b, cout, d) — a free reshape plus a slice only
    # when padding was actually applied.
    y = yflat.reshape(b_pad, cout, dp)
    if b_pad != b or dp != d:
        y = y[:b, :, :d]
    return y


def init_params(key, d, num_L, cin, cout):
    """Deterministic kaiming_normal_-style init (gain=sqrt(2), fan_in = prod(dims[1:]))."""
    kL, kW = jax.random.split(key)
    std_L = (2.0 / (d * d)) ** 0.5
    std_W = (2.0 / (cout * cin)) ** 0.5
    L = jax.random.normal(kL, (num_L, d, d), jnp.float32) * std_L
    Wi = jax.random.normal(kW, (num_L, cout, cin), jnp.float32) * std_W
    return L, Wi


if __name__ == "__main__":
    b, cin, cout, d, num_L = 2, 4, 4, 16, 2   # `rank` is unused in the forward pass
    key = jax.random.PRNGKey(0)
    kx, kp = jax.random.split(key)

    x = jax.random.normal(kx, (b, cin, d), jnp.float32)
    L, Wi = init_params(kp, d, num_L, cin, cout)

    y = lconv_core(x, L, Wi)
    y = jax.block_until_ready(y)

    # pure-JAX reference for correctness
    y_ref = jnp.einsum("kdf,bcf,koc->bod", L, x, Wi,
                       precision=lax.Precision.HIGHEST) + x
    assert y.shape == (b, cout, d)
    assert jnp.allclose(y, y_ref, atol=1e-4, rtol=1e-4), "mismatch vs reference"

    print("KERNEL_OK")
</pallas_src>

<mosaic_0001>
module attributes {stable_mosaic.version = 11 : i64} {
  func.func @_lconv_kernel(%arg0: i32, %arg1: i32, %arg2: memref<8x512xf32, #tpu.memory_space<vmem>>, %arg3: memref<512x512xf32, #tpu.memory_space<vmem>>, %arg4: memref<8x512xf32, #tpu.memory_space<vmem>>) attributes {dimension_semantics = [#tpu.dimension_semantics<parallel>, #tpu.dimension_semantics<parallel>], iteration_bounds = array<i64: 1, 1>, scalar_prefetch = 0 : i64, scratch_operands = 0 : i64, tpu.core_type = #tpu.core_type<tc>, window_params = [{transform_indices = @transform_0, window_bounds = array<i64: 8, 512>}, {transform_indices = @transform_1, window_bounds = array<i64: 512, 512>}, {transform_indices = @transform_2, window_bounds = array<i64: 8, 512>}]} {
    %c0 = arith.constant 0 : index
    %c0_0 = arith.constant 0 : index
    %0 = vector.load %arg2[%c0, %c0_0] : memref<8x512xf32, #tpu.memory_space<vmem>>, vector<8x512xf32>
    %c0_1 = arith.constant 0 : index
    %c0_2 = arith.constant 0 : index
    %1 = vector.load %arg3[%c0_1, %c0_2] : memref<512x512xf32, #tpu.memory_space<vmem>>, vector<512x512xf32>
    %cst = arith.constant dense<0.000000e+00> : vector<8x512xf32>
    %2 = tpu.matmul %0, %1, %cst {dimension_numbers = #tpu.dot_dimension_numbers<[1], [0], [0], [1], [0, 0, 1, 1], [], []>} : vector<8x512xf32>, vector<512x512xf32>, vector<8x512xf32> -> vector<8x512xf32>
    %c0_3 = arith.constant 0 : index
    %c0_4 = arith.constant 0 : index
    %3 = vector.load %arg2[%c0_3, %c0_4] : memref<8x512xf32, #tpu.memory_space<vmem>>, vector<8x512xf32>
    %4 = arith.addf %2, %3 : vector<8x512xf32>
    %c0_5 = arith.constant 0 : index
    %c0_6 = arith.constant 0 : index
    %5 = vector.load %arg4[%c0_5, %c0_6] : memref<8x512xf32, #tpu.memory_space<vmem>>, vector<8x512xf32>
    tpu.vector_store %arg4[%c0_5, %c0_6], %4 {strides = array<i32>} : memref<8x512xf32, #tpu.memory_space<vmem>>, vector<8x512xf32>,
    return
  }
  func.func @transform_0(%arg0: i32, %arg1: i32) -> (i32, i32) {
    %c0_i32 = arith.constant 0 : i32
    %c0_i32_0 = arith.constant 0 : i32
    return %arg0, %c0_i32 : i32, i32
  }
  func.func @transform_1(%arg0: i32, %arg1: i32) -> (i32, i32) {
    %c0_i32 = arith.constant 0 : i32
    %c0_i32_0 = arith.constant 0 : i32
    return %c0_i32, %arg1 : i32, i32
  }
  func.func @transform_2(%arg0: i32, %arg1: i32) -> (i32, i32) {
    %c0_i32 = arith.constant 0 : i32
    return %arg0, %arg1 : i32, i32
  }
}

</mosaic_0001>

<llo_original>
// kernel: tpu_custom_call.1
$region0: #{tpu_custom_call.1}
  #allocation0 [shape = 'u32[]', space=smem, size = 0x4, offset = 0x4, fixed_abs, tag = 'smem constant byte address 0x4 - core index']
  #allocation1 [shape = 'u32[72,128]{1,0:T(1,128)}', space=vmem, size = 0x9000, scoped, tag = 'internal scratch']
  %s0 = inlined_call_operand.hbm [shape: f32[8,512], index: 0, kind: input, shape index: {}]
  %s1 = inlined_call_operand.hbm [shape: f32[512,512], index: 1, kind: input, shape index: {}]
  %s2 = inlined_call_operand.hbm [shape: f32[8,512], index: 2, kind: output, shape index: {}]
  %s3 = sld [smem:[#allocation0]]
  $region26: #{tpu_custom_call.1} parent=0
    _
  %s5 = ssub.s32 1, %s3
  %s6 = scalar_select 0, %s5, %s3
  $region1: #{tpu_custom_call.1} parent=0
    #allocation2 [shape = 'u8[16384]{0}', space=vmem, size = 0x4000, scoped, tag = 'input window, operand 0, single buffered']
    #allocation3 [shape = 's32[1]{0}', space=sflag, size = 0x4, scoped, tag = 'scoped memory for tpu_custom_call.1']
    #allocation4 [shape = 's32[1]{0}', space=sflag, size = 0x4, scoped, tag = 'scoped memory for tpu_custom_call.1']
    #allocation5 [shape = 'u8[1048576]{0}', space=vmem, size = 0x100000, scoped, tag = 'input window, operand 1, single buffered']
    #allocation6 [shape = 's32[1]{0}', space=sflag, size = 0x4, scoped, tag = 'scoped memory for tpu_custom_call.1']
    #allocation7 [shape = 'u8[16384]{0}', space=vmem, size = 0x4000, scoped, tag = 'output window, operand 0, single buffered']
    %7 = vsyncpa [#allocation3], 0
    %8 = vsyncpa [#allocation6], 0
    %9 = vsyncpa [#allocation4], 0
    // Predicated region
    $region2: #{tpu_custom_call.1} parent=1 // pred_check
      _
    $region3: #{tpu_custom_call.1} parent=1 // pred_check_branch
      %11 = sbr.rel (0) target = $region5
    $region4: #{tpu_custom_call.1} parent=1 // pred_region
      %13 = vsyncadd [#allocation3], 0
      %s15 = sshll.u32 %s0, 4
      %s16 = int_to_ptr.hbm [resolvable:$true] %s15
      %s17 = sshll.u32 [#allocation2], 4
      %s18 = int_to_ptr.vmem [resolvable:$true] %s17
      %20 = dma.hbm_to_vmem [thread:$0]  %s16, 512, %s18, [#allocation3]
    $region5: #{tpu_custom_call.1} parent=1 // pred_fallthru
      _
    // Predicated region
    $region6: #{tpu_custom_call.1} parent=1 // pred_check
      _
    $region7: #{tpu_custom_call.1} parent=1 // pred_check_branch
      %22 = sbr.rel (0) target = $region9
    $region8: #{tpu_custom_call.1} parent=1 // pred_region
      %24 = vsyncadd [#allocation6], 0
      %s25 = sshll.u32 %s1, 4
      %s26 = int_to_ptr.hbm [resolvable:$true] %s25
      %s27 = sshll.u32 [#allocation5], 4
      %s28 = int_to_ptr.vmem [resolvable:$true] %s27
      %33 = dma.hbm_to_vmem [thread:$0]  %s26, 32768, %s28, [#allocation6], 512, 512, 32
    $region9: #{tpu_custom_call.1} parent=1 // pred_fallthru
      _
    // Predicated region
    $region10: #{tpu_custom_call.1} parent=1 // pred_check
      _
    $region11: #{tpu_custom_call.1} parent=1 // pred_check_branch
      %35 = sbr.rel (0) target = $region13
    $region12: #{tpu_custom_call.1} parent=1 // pred_region
      %37 = dma.done [#allocation3], 512
    $region13: #{tpu_custom_call.1} parent=1 // pred_fallthru
      _
    // Predicated region
    $region14: #{tpu_custom_call.1} parent=1 // pred_check
      _
    $region15: #{tpu_custom_call.1} parent=1 // pred_check_branch
      %39 = sbr.rel (0) target = $region17
    $region16: #{tpu_custom_call.1} parent=1 // pred_region
      %41 = dma.done [#allocation6], 32768
    $region17: #{tpu_custom_call.1} parent=1 // pred_fallthru
      _
    %v42 = vld [vmem:[#allocation2] sm:$0xff]
    %v43 = vld [vmem:[#allocation2 + $0x8] sm:$0xff]
    %v44 = vld [vmem:[#allocation2 + $0x10] sm:$0xff]
    %v45 = vld [vmem:[#allocation2 + $0x18] sm:$0xff]
    %v46 = vld [vmem:[#allocation5] sm:$0xff]
    %v47 = vld [vmem:[#allocation5 + $0x8] sm:$0xff]
    %v48 = vld [vmem:[#allocation5 + $0x10] sm:$0xff]
    %v49 = vld [vmem:[#allocation5 + $0x18] sm:$0xff]
    %v50 = vld [vmem:[#allocation5 + $0x20] sm:$0xff]
    %v51 = vld [vmem:[#allocation5 + $0x28] sm:$0xff]
    %v52 = vld [vmem:[#allocation5 + $0x30] sm:$0xff]
    %v53 = vld [vmem:[#allocation5 + $0x38] sm:$0xff]
    %v54 = vld [vmem:[#allocation5 + $0x40] sm:$0xff]
    %v55 = vld [vmem:[#allocation5 + $0x48] sm:$0xff]
    %v56 = vld [vmem:[#allocation5 + $0x50] sm:$0xff]
    %v57 = vld [vmem:[#allocation5 + $0x58] sm:$0xff]
    %v58 = vld [vmem:[#allocation5 + $0x60] sm:$0xff]
    %v59 = vld [vmem:[#allocation5 + $0x68] sm:$0xff]
    %v60 = vld [vmem:[#allocation5 + $0x70] sm:$0xff]
    %v61 = vld [vmem:[#allocation5 + $0x78] sm:$0xff]
    %v62 = vld [vmem:[#allocation5 + $0x80] sm:$0xff]
    %v63 = vld [vmem:[#allocation5 + $0x88] sm:$0xff]
    %v64 = vld [vmem:[#allocation5 + $0x90] sm:$0xff]
    %v65 = vld [vmem:[#allocation5 + $0x98] sm:$0xff]
    %v66 = vld [vmem:[#allocation5 + $0xa0] sm:$0xff]
    %v67 = vld [vmem:[#allocation5 + $0xa8] sm:$0xff]
    %v68 = vld [vmem:[#allocation5 + $0xb0] sm:$0xff]
    %v69 = vld [vmem:[#allocation5 + $0xb8] sm:$0xff]
    %v70 = vld [vmem:[#allocation5 + $0xc0] sm:$0xff]
    %v71 = vld [vmem:[#allocation5 + $0xc8] sm:$0xff]
    %v72 = vld [vmem:[#allocation5 + $0xd0] sm:$0xff]
    %v73 = vld [vmem:[#allocation5 + $0xd8] sm:$0xff]
    %v74 = vld [vmem:[#allocation5 + $0xe0] sm:$0xff]
    %v75 = vld [vmem:[#allocation5 + $0xe8] sm:$0xff]
    %v76 = vld [vmem:[#allocation5 + $0xf0] sm:$0xff]
    %v77 = vld [vmem:[#allocation5 + $0xf8] sm:$0xff]
    %v78 = vld [vmem:[#allocation5 + $0x100] sm:$0xff]
    %v79 = vld [vmem:[#allocation5 + $0x108] sm:$0xff]
    %v80 = vld [vmem:[#allocation5 + $0x110] sm:$0xff]
    %v81 = vld [vmem:[#allocation5 + $0x118] sm:$0xff]
    %v82 = vld [vmem:[#allocation5 + $0x120] sm:$0xff]
    %v83 = vld [vmem:[#allocation5 + $0x128] sm:$0xff]
    %v84 = vld [vmem:[#allocation5 + $0x130] sm:$0xff]
    %v85 = vld [vmem:[#allocation5 + $0x138] sm:$0xff]
    %v86 = vld [vmem:[#allocation5 + $0x140] sm:$0xff]
    %v87 = vld [vmem:[#allocation5 + $0x148] sm:$0xff]
    %v88 = vld [vmem:[#allocation5 + $0x150] sm:$0xff]
    %v89 = vld [vmem:[#allocation5 + $0x158] sm:$0xff]
    %v90 = vld [vmem:[#allocation5 + $0x160] sm:$0xff]
    %v91 = vld [vmem:[#allocation5 + $0x168] sm:$0xff]
    %v92 = vld [vmem:[#allocation5 + $0x170] sm:$0xff]
    %v93 = vld [vmem:[#allocation5 + $0x178] sm:$0xff]
    %v94 = vld [vmem:[#allocation5 + $0x180] sm:$0xff]
    %v95 = vld [vmem:[#allocation5 + $0x188] sm:$0xff]
    %v96 = vld [vmem:[#allocation5 + $0x190] sm:$0xff]
    %v97 = vld [vmem:[#allocation5 + $0x198] sm:$0xff]
    %v98 = vld [vmem:[#allocation5 + $0x1a0] sm:$0xff]
    %v99 = vld [vmem:[#allocation5 + $0x1a8] sm:$0xff]
    %v100 = vld [vmem:[#allocation5 + $0x1b0] sm:$0xff]
    %v101 = vld [vmem:[#allocation5 + $0x1b8] sm:$0xff]
    %v102 = vld [vmem:[#allocation5 + $0x1c0] sm:$0xff]
    %v103 = vld [vmem:[#allocation5 + $0x1c8] sm:$0xff]
    %v104 = vld [vmem:[#allocation5 + $0x1d0] sm:$0xff]
    %v105 = vld [vmem:[#allocation5 + $0x1d8] sm:$0xff]
    %v106 = vld [vmem:[#allocation5 + $0x1e0] sm:$0xff]
    %v107 = vld [vmem:[#allocation5 + $0x1e8] sm:$0xff]
    %v108 = vld [vmem:[#allocation5 + $0x1f0] sm:$0xff]
    %v109 = vld [vmem:[#allocation5 + $0x1f8] sm:$0xff]
    %v110 = vld [vmem:[#allocation5 + $0x200] sm:$0xff]
    %v111 = vld [vmem:[#allocation5 + $0x208] sm:$0xff]
    %v112 = vld [vmem:[#allocation5 + $0x210] sm:$0xff]
    %v113 = vld [vmem:[#allocation5 + $0x218] sm:$0xff]
    %v114 = vld [vmem:[#allocation5 + $0x220] sm:$0xff]
    %v115 = vld [vmem:[#allocation5 + $0x228] sm:$0xff]
    %v116 = vld [vmem:[#allocation5 + $0x230] sm:$0xff]
    %v117 = vld [vmem:[#allocation5 + $0x238] sm:$0xff]
    %v118 = vld [vmem:[#allocation5 + $0x240] sm:$0xff]
    %v119 = vld [vmem:[#allocation5 + $0x248] sm:$0xff]
    %v120 = vld [vmem:[#allocation5 + $0x250] sm:$0xff]
    %v121 = vld [vmem:[#allocation5 + $0x258] sm:$0xff]
    %v122 = vld [vmem:[#allocation5 + $0x260] sm:$0xff]
    %v123 = vld [vmem:[#allocation5 + $0x268] sm:$0xff]
    %v124 = vld [vmem:[#allocation5 + $0x270] sm:$0xff]
    %v125 = vld [vmem:[#allocation5 + $0x278] sm:$0xff]
    %v126 = vld [vmem:[#allocation5 + $0x280] sm:$0xff]
    %v127 = vld [vmem:[#allocation5 + $0x288] sm:$0xff]
    %v128 = vld [vmem:[#allocation5 + $0x290] sm:$0xff]
    %v129 = vld [vmem:[#allocation5 + $0x298] sm:$0xff]
    %v130 = vld [vmem:[#allocation5 + $0x2a0] sm:$0xff]
    %v131 = vld [vmem:[#allocation5 + $0x2a8] sm:$0xff]
    %v132 = vld [vmem:[#allocation5 + $0x2b0] sm:$0xff]
    %v133 = vld [vmem:[#allocation5 + $0x2b8] sm:$0xff]
    %v134 = vld [vmem:[#allocation5 + $0x2c0] sm:$0xff]
    %v135 = vld [vmem:[#allocation5 + $0x2c8] sm:$0xff]
    %v136 = vld [vmem:[#allocation5 + $0x2d0] sm:$0xff]
    %v137 = vld [vmem:[#allocation5 + $0x2d8] sm:$0xff]
    %v138 = vld [vmem:[#allocation5 + $0x2e0] sm:$0xff]
    %v139 = vld [vmem:[#allocation5 + $0x2e8] sm:$0xff]
    %v140 = vld [vmem:[#allocation5 + $0x2f0] sm:$0xff]
    %v141 = vld [vmem:[#allocation5 + $0x2f8] sm:$0xff]
    %v142 = vld [vmem:[#allocation5 + $0x300] sm:$0xff]
    %v143 = vld [vmem:[#allocation5 + $0x308] sm:$0xff]
    %v144 = vld [vmem:[#allocation5 + $0x310] sm:$0xff]
    %v145 = vld [vmem:[#allocation5 + $0x318] sm:$0xff]
    %v146 = vld [vmem:[#allocation5 + $0x320] sm:$0xff]
    %v147 = vld [vmem:[#allocation5 + $0x328] sm:$0xff]
    %v148 = vld [vmem:[#allocation5 + $0x330] sm:$0xff]
    %v149 = vld [vmem:[#allocation5 + $0x338] sm:$0xff]
    %v150 = vld [vmem:[#allocation5 + $0x340] sm:$0xff]
    %v151 = vld [vmem:[#allocation5 + $0x348] sm:$0xff]
    %v152 = vld [vmem:[#allocation5 + $0x350] sm:$0xff]
    %v153 = vld [vmem:[#allocation5 + $0x358] sm:$0xff]
    %v154 = vld [vmem:[#allocation5 + $0x360] sm:$0xff]
    %v155 = vld [vmem:[#allocation5 + $0x368] sm:$0xff]
    %v156 = vld [vmem:[#allocation5 + $0x370] sm:$0xff]
    %v157 = vld [vmem:[#allocation5 + $0x378] sm:$0xff]
    %v158 = vld [vmem:[#allocation5 + $0x380] sm:$0xff]
    %v159 = vld [vmem:[#allocation5 + $0x388] sm:$0xff]
    %v160 = vld [vmem:[#allocation5 + $0x390] sm:$0xff]
    %v161 = vld [vmem:[#allocation5 + $0x398] sm:$0xff]
    %v162 = vld [vmem:[#allocation5 + $0x3a0] sm:$0xff]
    %v163 = vld [vmem:[#allocation5 + $0x3a8] sm:$0xff]
    %v164 = vld [vmem:[#allocation5 + $0x3b0] sm:$0xff]
    %v165 = vld [vmem:[#allocation5 + $0x3b8] sm:$0xff]
    %v166 = vld [vmem:[#allocation5 + $0x3c0] sm:$0xff]
    %v167 = vld [vmem:[#allocation5 + $0x3c8] sm:$0xff]
    %v168 = vld [vmem:[#allocation5 + $0x3d0] sm:$0xff]
    %v169 = vld [vmem:[#allocation5 + $0x3d8] sm:$0xff]
    %v170 = vld [vmem:[#allocation5 + $0x3e0] sm:$0xff]
    %v171 = vld [vmem:[#allocation5 + $0x3e8] sm:$0xff]
    %v172 = vld [vmem:[#allocation5 + $0x3f0] sm:$0xff]
    %v173 = vld [vmem:[#allocation5 + $0x3f8] sm:$0xff]
    %v174 = vld [vmem:[#allocation5 + $0x400] sm:$0xff]
    %v175 = vld [vmem:[#allocation5 + $0x408] sm:$0xff]
    %v176 = vld [vmem:[#allocation5 + $0x410] sm:$0xff]
    %v177 = vld [vmem:[#allocation5 + $0x418] sm:$0xff]
    %v178 = vld [vmem:[#allocation5 + $0x420] sm:$0xff]
    %v179 = vld [vmem:[#allocation5 + $0x428] sm:$0xff]
    %v180 = vld [vmem:[#allocation5 + $0x430] sm:$0xff]
    %v181 = vld [vmem:[#allocation5 + $0x438] sm:$0xff]
    %v182 = vld [vmem:[#allocation5 + $0x440] sm:$0xff]
    %v183 = vld [vmem:[#allocation5 + $0x448] sm:$0xff]
    %v184 = vld [vmem:[#allocation5 + $0x450] sm:$0xff]
    %v185 = vld [vmem:[#allocation5 + $0x458] sm:$0xff]
    %v186 = vld [vmem:[#allocation5 + $0x460] sm:$0xff]
    %v187 = vld [vmem:[#allocation5 + $0x468] sm:$0xff]
    %v188 = vld [vmem:[#allocation5 + $0x470] sm:$0xff]
    %v189 = vld [vmem:[#allocation5 + $0x478] sm:$0xff]
    %v190 = vld [vmem:[#allocation5 + $0x480] sm:$0xff]
    %v191 = vld [vmem:[#allocation5 + $0x488] sm:$0xff]
    %v192 = vld [vmem:[#allocation5 + $0x490] sm:$0xff]
    %v193 = vld [vmem:[#allocation5 + $0x498] sm:$0xff]
    %v194 = vld [vmem:[#allocation5 + $0x4a0] sm:$0xff]
    %v195 = vld [vmem:[#allocation5 + $0x4a8] sm:$0xff]
    %v196 = vld [vmem:[#allocation5 + $0x4b0] sm:$0xff]
    %v197 = vld [vmem:[#allocation5 + $0x4b8] sm:$0xff]
    %v198 = vld [vmem:[#allocation5 + $0x4c0] sm:$0xff]
    %v199 = vld [vmem:[#allocation5 + $0x4c8] sm:$0xff]
    %v200 = vld [vmem:[#allocation5 + $0x4d0] sm:$0xff]
    %v201 = vld [vmem:[#allocation5 + $0x4d8] sm:$0xff]
    %v202 = vld [vmem:[#allocation5 + $0x4e0] sm:$0xff]
    %v203 = vld [vmem:[#allocation5 + $0x4e8] sm:$0xff]
    %v204 = vld [vmem:[#allocation5 + $0x4f0] sm:$0xff]
    %v205 = vld [vmem:[#allocation5 + $0x4f8] sm:$0xff]
    %v206 = vld [vmem:[#allocation5 + $0x500] sm:$0xff]
    %v207 = vld [vmem:[#allocation5 + $0x508] sm:$0xff]
    %v208 = vld [vmem:[#allocation5 + $0x510] sm:$0xff]
    %v209 = vld [vmem:[#allocation5 + $0x518] sm:$0xff]
    %v210 = vld [vmem:[#allocation5 + $0x520] sm:$0xff]
    %v211 = vld [vmem:[#allocation5 + $0x528] sm:$0xff]
    %v212 = vld [vmem:[#allocation5 + $0x530] sm:$0xff]
    %v213 = vld [vmem:[#allocation5 + $0x538] sm:$0xff]
    %v214 = vld [vmem:[#allocation5 + $0x540] sm:$0xff]
    %v215 = vld [vmem:[#allocation5 + $0x548] sm:$0xff]
    %v216 = vld [vmem:[#allocation5 + $0x550] sm:$0xff]
    %v217 = vld [vmem:[#allocation5 + $0x558] sm:$0xff]
    %v218 = vld [vmem:[#allocation5 + $0x560] sm:$0xff]
    %v219 = vld [vmem:[#allocation5 + $0x568] sm:$0xff]
    %v220 = vld [vmem:[#allocation5 + $0x570] sm:$0xff]
    %v221 = vld [vmem:[#allocation5 + $0x578] sm:$0xff]
    %v222 = vld [vmem:[#allocation5 + $0x580] sm:$0xff]
    %v223 = vld [vmem:[#allocation5 + $0x588] sm:$0xff]
    %v224 = vld [vmem:[#allocation5 + $0x590] sm:$0xff]
    %v225 = vld [vmem:[#allocation5 + $0x598] sm:$0xff]
    %v226 = vld [vmem:[#allocation5 + $0x5a0] sm:$0xff]
    %v227 = vld [vmem:[#allocation5 + $0x5a8] sm:$0xff]
    %v228 = vld [vmem:[#allocation5 + $0x5b0] sm:$0xff]
    %v229 = vld [vmem:[#allocation5 + $0x5b8] sm:$0xff]
    %v230 = vld [vmem:[#allocation5 + $0x5c0] sm:$0xff]
    %v231 = vld [vmem:[#allocation5 + $0x5c8] sm:$0xff]
    %v232 = vld [vmem:[#allocation5 + $0x5d0] sm:$0xff]
    %v233 = vld [vmem:[#allocation5 + $0x5d8] sm:$0xff]
    %v234 = vld [vmem:[#allocation5 + $0x5e0] sm:$0xff]
    %v235 = vld [vmem:[#allocation5 + $0x5e8] sm:$0xff]
    %v236 = vld [vmem:[#allocation5 + $0x5f0] sm:$0xff]
    %v237 = vld [vmem:[#allocation5 + $0x5f8] sm:$0xff]
    %v238 = vld [vmem:[#allocation5 + $0x600] sm:$0xff]
    %v239 = vld [vmem:[#allocation5 + $0x608] sm:$0xff]
    %v240 = vld [vmem:[#allocation5 + $0x610] sm:$0xff]
    %v241 = vld [vmem:[#allocation5 + $0x618] sm:$0xff]
    %v242 = vld [vmem:[#allocation5 + $0x620] sm:$0xff]
    %v243 = vld [vmem:[#allocation5 + $0x628] sm:$0xff]
    %v244 = vld [vmem:[#allocation5 + $0x630] sm:$0xff]
    %v245 = vld [vmem:[#allocation5 + $0x638] sm:$0xff]
    %v246 = vld [vmem:[#allocation5 + $0x640] sm:$0xff]
    %v247 = vld [vmem:[#allocation5 + $0x648] sm:$0xff]
    %v248 = vld [vmem:[#allocation5 + $0x650] sm:$0xff]
    %v249 = vld [vmem:[#allocation5 + $0x658] sm:$0xff]
    %v250 = vld [vmem:[#allocation5 + $0x660] sm:$0xff]
    %v251 = vld [vmem:[#allocation5 + $0x668] sm:$0xff]
    %v252 = vld [vmem:[#allocation5 + $0x670] sm:$0xff]
    %v253 = vld [vmem:[#allocation5 + $0x678] sm:$0xff]
    %v254 = vld [vmem:[#allocation5 + $0x680] sm:$0xff]
    %v255 = vld [vmem:[#allocation5 + $0x688] sm:$0xff]
    %v256 = vld [vmem:[#allocation5 + $0x690] sm:$0xff]
    %v257 = vld [vmem:[#allocation5 + $0x698] sm:$0xff]
    %v258 = vld [vmem:[#allocation5 + $0x6a0] sm:$0xff]
    %v259 = vld [vmem:[#allocation5 + $0x6a8] sm:$0xff]
    %v260 = vld [vmem:[#allocation5 + $0x6b0] sm:$0xff]
    %v261 = vld [vmem:[#allocation5 + $0x6b8] sm:$0xff]
    %v262 = vld [vmem:[#allocation5 + $0x6c0] sm:$0xff]
    %v263 = vld [vmem:[#allocation5 + $0x6c8] sm:$0xff]
    %v264 = vld [vmem:[#allocation5 + $0x6d0] sm:$0xff]
    %v265 = vld [vmem:[#allocation5 + $0x6d8] sm:$0xff]
    %v266 = vld [vmem:[#allocation5 + $0x6e0] sm:$0xff]
    %v267 = vld [vmem:[#allocation5 + $0x6e8] sm:$0xff]
    %v268 = vld [vmem:[#allocation5 + $0x6f0] sm:$0xff]
    %v269 = vld [vmem:[#allocation5 + $0x6f8] sm:$0xff]
    %v270 = vld [vmem:[#allocation5 + $0x700] sm:$0xff]
    %v271 = vld [vmem:[#allocation5 + $0x708] sm:$0xff]
    %v272 = vld [vmem:[#allocation5 + $0x710] sm:$0xff]
    %v273 = vld [vmem:[#allocation5 + $0x718] sm:$0xff]
    %v274 = vld [vmem:[#allocation5 + $0x720] sm:$0xff]
    %v275 = vld [vmem:[#allocation5 + $0x728] sm:$0xff]
    %v276 = vld [vmem:[#allocation5 + $0x730] sm:$0xff]
    %v277 = vld [vmem:[#allocation5 + $0x738] sm:$0xff]
    %v278 = vld [vmem:[#allocation5 + $0x740] sm:$0xff]
    %v279 = vld [vmem:[#allocation5 + $0x748] sm:$0xff]
    %v280 = vld [vmem:[#allocation5 + $0x750] sm:$0xff]
    %v281 = vld [vmem:[#allocation5 + $0x758] sm:$0xff]
    %v282 = vld [vmem:[#allocation5 + $0x760] sm:$0xff]
    %v283 = vld [vmem:[#allocation5 + $0x768] sm:$0xff]
    %v284 = vld [vmem:[#allocation5 + $0x770] sm:$0xff]
    %v285 = vld [vmem:[#allocation5 + $0x778] sm:$0xff]
    %v286 = vld [vmem:[#allocation5 + $0x780] sm:$0xff]
    %v287 = vld [vmem:[#allocation5 + $0x788] sm:$0xff]
    %v288 = vld [vmem:[#allocation5 + $0x790] sm:$0xff]
    %v289 = vld [vmem:[#allocation5 + $0x798] sm:$0xff]
    %v290 = vld [vmem:[#allocation5 + $0x7a0] sm:$0xff]
    %v291 = vld [vmem:[#allocation5 + $0x7a8] sm:$0xff]
    %v292 = vld [vmem:[#allocation5 + $0x7b0] sm:$0xff]
    %v293 = vld [vmem:[#allocation5 + $0x7b8] sm:$0xff]
    %v294 = vld [vmem:[#allocation5 + $0x7c0] sm:$0xff]
    %v295 = vld [vmem:[#allocation5 + $0x7c8] sm:$0xff]
    %v296 = vld [vmem:[#allocation5 + $0x7d0] sm:$0xff]
    %v297 = vld [vmem:[#allocation5 + $0x7d8] sm:$0xff]
    %v298 = vld [vmem:[#allocation5 + $0x7e0] sm:$0xff]
    %v299 = vld [vmem:[#allocation5 + $0x7e8] sm:$0xff]
    %v300 = vld [vmem:[#allocation5 + $0x7f0] sm:$0xff]
    %v301 = vld [vmem:[#allocation5 + $0x7f8] sm:$0xff]
    %302 = vmatpush.msra.mxu0 %v106
    %303 = vmatpush.msra.mxu0 %v102
    %304 = vmatpush.msra.mxu0 %v98
    %305 = vmatpush.msra.mxu0 %v94
    %306 = vmatpush.msra.mxu0 %v90
    %307 = vmatpush.msra.mxu0 %v86
    %308 = vmatpush.msra.mxu0 %v82
    %309 = vmatpush.msra.mxu0 %v78
    %310 = vmatpush.msra.mxu0 %v74
    %311 = vmatpush.msra.mxu0 %v70
    %312 = vmatpush.msra.mxu0 %v66
    %313 = vmatpush.msra.mxu0 %v62
    %314 = vmatpush.msra.mxu0 %v58
    %315 = vmatpush.msra.mxu0 %v54
    %316 = vmatpush.msra.mxu0 %v50
    %317 = vmatpush.msra.mxu0 %v46
    %318 = vmatmul.f32.gmra.mxu0 %v42
    %v319 = vpop.f32.mrf.mxu0
    %v320 = vadd.f32 %v42, %v319
    %321 = vdwg.mxu0
    %322 = vmatpush.msra.mxu0 %v170
    %323 = vmatpush.msra.mxu0 %v166
    %324 = vmatpush.msra.mxu0 %v162
    %325 = vmatpush.msra.mxu0 %v158
    %326 = vmatpush.msra.mxu0 %v154
    %327 = vmatpush.msra.mxu0 %v150
    %328 = vmatpush.msra.mxu0 %v146
    %329 = vmatpush.msra.mxu0 %v142
    %330 = vmatpush.msra.mxu0 %v138
    %331 = vmatpush.msra.mxu0 %v134
    %332 = vmatpush.msra.mxu0 %v130
    %333 = vmatpush.msra.mxu0 %v126
    %334 = vmatpush.msra.mxu0 %v122
    %335 = vmatpush.msra.mxu0 %v118
    %336 = vmatpush.msra.mxu0 %v114
    %337 = vmatpush.msra.mxu0 %v110
    %338 = vmatmul.f32.gmra.mxu0 %v43
    %v339 = vpop.f32.mrf.mxu0
    %v340 = vadd.f32 %v320, %v339
    %341 = vdwg.mxu0
    %342 = vmatpush.msra.mxu0 %v234
    %343 = vmatpush.msra.mxu0 %v230
    %344 = vmatpush.msra.mxu0 %v226
    %345 = vmatpush.msra.mxu0 %v222
    %346 = vmatpush.msra.mxu0 %v218
    %347 = vmatpush.msra.mxu0 %v214
    %348 = vmatpush.msra.mxu0 %v210
    %349 = vmatpush.msra.mxu0 %v206
    %350 = vmatpush.msra.mxu0 %v202
    %351 = vmatpush.msra.mxu0 %v198
    %352 = vmatpush.msra.mxu0 %v194
    %353 = vmatpush.msra.mxu0 %v190
    %354 = vmatpush.msra.mxu0 %v186
    %355 = vmatpush.msra.mxu0 %v182
    %356 = vmatpush.msra.mxu0 %v178
    %357 = vmatpush.msra.mxu0 %v174
    %358 = vmatmul.f32.gmra.mxu0 %v44
    %v359 = vpop.f32.mrf.mxu0
    %v360 = vadd.f32 %v340, %v359
    %361 = vdwg.mxu0
    %362 = vmatpush.msra.mxu0 %v298
    %363 = vmatpush.msra.mxu0 %v294
    %364 = vmatpush.msra.mxu0 %v290
    %365 = vmatpush.msra.mxu0 %v286
    %366 = vmatpush.msra.mxu0 %v282
    %367 = vmatpush.msra.mxu0 %v278
    %368 = vmatpush.msra.mxu0 %v274
    %369 = vmatpush.msra.mxu0 %v270
    %370 = vmatpush.msra.mxu0 %v266
    %371 = vmatpush.msra.mxu0 %v262
    %372 = vmatpush.msra.mxu0 %v258
    %373 = vmatpush.msra.mxu0 %v254
    %374 = vmatpush.msra.mxu0 %v250
    %375 = vmatpush.msra.mxu0 %v246
    %376 = vmatpush.msra.mxu0 %v242
    %377 = vmatpush.msra.mxu0 %v238
    %378 = vmatmul.f32.gmra.mxu0 %v45
    %v379 = vpop.f32.mrf.mxu0
    %v380 = vadd.f32 %v360, %v379
    %381 = vdwg.mxu0
    %382 = vmatpush.msra.mxu0 %v107
    %383 = vmatpush.msra.mxu0 %v103
    %384 = vmatpush.msra.mxu0 %v99
    %385 = vmatpush.msra.mxu0 %v95
    %386 = vmatpush.msra.mxu0 %v91
    %387 = vmatpush.msra.mxu0 %v87
    %388 = vmatpush.msra.mxu0 %v83
    %389 = vmatpush.msra.mxu0 %v79
    %390 = vmatpush.msra.mxu0 %v75
    %391 = vmatpush.msra.mxu0 %v71
    %392 = vmatpush.msra.mxu0 %v67
    %393 = vmatpush.msra.mxu0 %v63
    %394 = vmatpush.msra.mxu0 %v59
    %395 = vmatpush.msra.mxu0 %v55
    %396 = vmatpush.msra.mxu0 %v51
    %397 = vmatpush.msra.mxu0 %v47
    %398 = vmatmul.f32.gmra.mxu0 %v42
    %v399 = vpop.f32.mrf.mxu0
    %v400 = vadd.f32 %v43, %v399
    %401 = vdwg.mxu0
    %402 = vmatpush.msra.mxu0 %v171
    %403 = vmatpush.msra.mxu0 %v167
    %404 = vmatpush.msra.mxu0 %v163
    %405 = vmatpush.msra.mxu0 %v159
    %406 = vmatpush.msra.mxu0 %v155
    %407 = vmatpush.msra.mxu0 %v151
    %408 = vmatpush.msra.mxu0 %v147
    %409 = vmatpush.msra.mxu0 %v143
    %410 = vmatpush.msra.mxu0 %v139
    %411 = vmatpush.msra.mxu0 %v135
    %412 = vmatpush.msra.mxu0 %v131
    %413 = vmatpush.msra.mxu0 %v127
    %414 = vmatpush.msra.mxu0 %v123
    %415 = vmatpush.msra.mxu0 %v119
    %416 = vmatpush.msra.mxu0 %v115
    %417 = vmatpush.msra.mxu0 %v111
    %418 = vmatmul.f32.gmra.mxu0 %v43
    %v419 = vpop.f32.mrf.mxu0
    %v420 = vadd.f32 %v400, %v419
    %421 = vdwg.mxu0
    %422 = vmatpush.msra.mxu0 %v235
    %423 = vmatpush.msra.mxu0 %v231
    %424 = vmatpush.msra.mxu0 %v227
    %425 = vmatpush.msra.mxu0 %v223
    %426 = vmatpush.msra.mxu0 %v219
    %427 = vmatpush.msra.mxu0 %v215
    %428 = vmatpush.msra.mxu0 %v211
    %429 = vmatpush.msra.mxu0 %v207
    %430 = vmatpush.msra.mxu0 %v203
    %431 = vmatpush.msra.mxu0 %v199
    %432 = vmatpush.msra.mxu0 %v195
    %433 = vmatpush.msra.mxu0 %v191
    %434 = vmatpush.msra.mxu0 %v187
    %435 = vmatpush.msra.mxu0 %v183
    %436 = vmatpush.msra.mxu0 %v179
    %437 = vmatpush.msra.mxu0 %v175
    %438 = vmatmul.f32.gmra.mxu0 %v44
    %v439 = vpop.f32.mrf.mxu0
    %v440 = vadd.f32 %v420, %v439
    %441 = vdwg.mxu0
    %442 = vmatpush.msra.mxu0 %v299
    %443 = vmatpush.msra.mxu0 %v295
    %444 = vmatpush.msra.mxu0 %v291
    %445 = vmatpush.msra.mxu0 %v287
    %446 = vmatpush.msra.mxu0 %v283
    %447 = vmatpush.msra.mxu0 %v279
    %448 = vmatpush.msra.mxu0 %v275
    %449 = vmatpush.msra.mxu0 %v271
    %450 = vmatpush.msra.mxu0 %v267
    %451 = vmatpush.msra.mxu0 %v263
    %452 = vmatpush.msra.mxu0 %v259
    %453 = vmatpush.msra.mxu0 %v255
    %454 = vmatpush.msra.mxu0 %v251
    %455 = vmatpush.msra.mxu0 %v247
    %456 = vmatpush.msra.mxu0 %v243
    %457 = vmatpush.msra.mxu0 %v239
    %458 = vmatmul.f32.gmra.mxu0 %v45
    %v459 = vpop.f32.mrf.mxu0
    %v460 = vadd.f32 %v440, %v459
    %461 = vdwg.mxu0
    %462 = vmatpush.msra.mxu0 %v108
    %463 = vmatpush.msra.mxu0 %v104
    %464 = vmatpush.msra.mxu0 %v100
    %465 = vmatpush.msra.mxu0 %v96
    %466 = vmatpush.msra.mxu0 %v92
    %467 = vmatpush.msra.mxu0 %v88
    %468 = vmatpush.msra.mxu0 %v84
    %469 = vmatpush.msra.mxu0 %v80
    %470 = vmatpush.msra.mxu0 %v76
    %471 = vmatpush.msra.mxu0 %v72
    %472 = vmatpush.msra.mxu0 %v68
    %473 = vmatpush.msra.mxu0 %v64
    %474 = vmatpush.msra.mxu0 %v60
    %475 = vmatpush.msra.mxu0 %v56
    %476 = vmatpush.msra.mxu0 %v52
    %477 = vmatpush.msra.mxu0 %v48
    %478 = vmatmul.f32.gmra.mxu0 %v42
    %v479 = vpop.f32.mrf.mxu0
    %v480 = vadd.f32 %v44, %v479
    %481 = vdwg.mxu0
    %482 = vmatpush.msra.mxu0 %v172
    %483 = vmatpush.msra.mxu0 %v168
    %484 = vmatpush.msra.mxu0 %v164
    %485 = vmatpush.msra.mxu0 %v160
    %486 = vmatpush.msra.mxu0 %v156
    %487 = vmatpush.msra.mxu0 %v152
    %488 = vmatpush.msra.mxu0 %v148
    %489 = vmatpush.msra.mxu0 %v144
    %490 = vmatpush.msra.mxu0 %v140
    %491 = vmatpush.msra.mxu0 %v136
    %492 = vmatpush.msra.mxu0 %v132
    %493 = vmatpush.msra.mxu0 %v128
    %494 = vmatpush.msra.mxu0 %v124
    %495 = vmatpush.msra.mxu0 %v120
    %496 = vmatpush.msra.mxu0 %v116
    %497 = vmatpush.msra.mxu0 %v112
    %498 = vmatmul.f32.gmra.mxu0 %v43
    %v499 = vpop.f32.mrf.mxu0
    %v500 = vadd.f32 %v480, %v499
    %501 = vdwg.mxu0
    %502 = vmatpush.msra.mxu0 %v236
    %503 = vmatpush.msra.mxu0 %v232
    %504 = vmatpush.msra.mxu0 %v228
    %505 = vmatpush.msra.mxu0 %v224
    %506 = vmatpush.msra.mxu0 %v220
    %507 = vmatpush.msra.mxu0 %v216
    %508 = vmatpush.msra.mxu0 %v212
    %509 = vmatpush.msra.mxu0 %v208
    %510 = vmatpush.msra.mxu0 %v204
    %511 = vmatpush.msra.mxu0 %v200
    %512 = vmatpush.msra.mxu0 %v196
    %513 = vmatpush.msra.mxu0 %v192
    %514 = vmatpush.msra.mxu0 %v188
    %515 = vmatpush.msra.mxu0 %v184
    %516 = vmatpush.msra.mxu0 %v180
    %517 = vmatpush.msra.mxu0 %v176
    %518 = vmatmul.f32.gmra.mxu0 %v44
    %v519 = vpop.f32.mrf.mxu0
    %v520 = vadd.f32 %v500, %v519
    %521 = vdwg.mxu0
    %522 = vmatpush.msra.mxu0 %v300
    %523 = vmatpush.msra.mxu0 %v296
    %524 = vmatpush.msra.mxu0 %v292
    %525 = vmatpush.msra.mxu0 %v288
    %526 = vmatpush.msra.mxu0 %v284
    %527 = vmatpush.msra.mxu0 %v280
    %528 = vmatpush.msra.mxu0 %v276
    %529 = vmatpush.msra.mxu0 %v272
    %530 = vmatpush.msra.mxu0 %v268
    %531 = vmatpush.msra.mxu0 %v264
    %532 = vmatpush.msra.mxu0 %v260
    %533 = vmatpush.msra.mxu0 %v256
    %534 = vmatpush.msra.mxu0 %v252
    %535 = vmatpush.msra.mxu0 %v248
    %536 = vmatpush.msra.mxu0 %v244
    %537 = vmatpush.msra.mxu0 %v240
    %538 = vmatmul.f32.gmra.mxu0 %v45
    %v539 = vpop.f32.mrf.mxu0
    %v540 = vadd.f32 %v520, %v539
    %541 = vdwg.mxu0
    %542 = vmatpush.msra.mxu0 %v109
    %543 = vmatpush.msra.mxu0 %v105
    %544 = vmatpush.msra.mxu0 %v101
    %545 = vmatpush.msra.mxu0 %v97
    %546 = vmatpush.msra.mxu0 %v93
    %547 = vmatpush.msra.mxu0 %v89
    %548 = vmatpush.msra.mxu0 %v85
    %549 = vmatpush.msra.mxu0 %v81
    %550 = vmatpush.msra.mxu0 %v77
    %551 = vmatpush.msra.mxu0 %v73
    %552 = vmatpush.msra.mxu0 %v69
    %553 = vmatpush.msra.mxu0 %v65
    %554 = vmatpush.msra.mxu0 %v61
    %555 = vmatpush.msra.mxu0 %v57
    %556 = vmatpush.msra.mxu0 %v53
    %557 = vmatpush.msra.mxu0 %v49
    %558 = vmatmul.f32.gmra.mxu0 %v42
    %v559 = vpop.f32.mrf.mxu0
    %v560 = vadd.f32 %v45, %v559
    %561 = vdwg.mxu0
    %562 = vmatpush.msra.mxu0 %v173
    %563 = vmatpush.msra.mxu0 %v169
    %564 = vmatpush.msra.mxu0 %v165
    %565 = vmatpush.msra.mxu0 %v161
    %566 = vmatpush.msra.mxu0 %v157
    %567 = vmatpush.msra.mxu0 %v153
    %568 = vmatpush.msra.mxu0 %v149
    %569 = vmatpush.msra.mxu0 %v145
    %570 = vmatpush.msra.mxu0 %v141
    %571 = vmatpush.msra.mxu0 %v137
    %572 = vmatpush.msra.mxu0 %v133
    %573 = vmatpush.msra.mxu0 %v129
    %574 = vmatpush.msra.mxu0 %v125
    %575 = vmatpush.msra.mxu0 %v121
    %576 = vmatpush.msra.mxu0 %v117
    %577 = vmatpush.msra.mxu0 %v113
    %578 = vmatmul.f32.gmra.mxu0 %v43
    %v579 = vpop.f32.mrf.mxu0
    %v580 = vadd.f32 %v560, %v579
    %581 = vdwg.mxu0
    %582 = vmatpush.msra.mxu0 %v237
    %583 = vmatpush.msra.mxu0 %v233
    %584 = vmatpush.msra.mxu0 %v229
    %585 = vmatpush.msra.mxu0 %v225
    %586 = vmatpush.msra.mxu0 %v221
    %587 = vmatpush.msra.mxu0 %v217
    %588 = vmatpush.msra.mxu0 %v213
    %589 = vmatpush.msra.mxu0 %v209
    %590 = vmatpush.msra.mxu0 %v205
    %591 = vmatpush.msra.mxu0 %v201
    %592 = vmatpush.msra.mxu0 %v197
    %593 = vmatpush.msra.mxu0 %v193
    %594 = vmatpush.msra.mxu0 %v189
    %595 = vmatpush.msra.mxu0 %v185
    %596 = vmatpush.msra.mxu0 %v181
    %597 = vmatpush.msra.mxu0 %v177
    %598 = vmatmul.f32.gmra.mxu0 %v44
    %v599 = vpop.f32.mrf.mxu0
    %v600 = vadd.f32 %v580, %v599
    %601 = vdwg.mxu0
    %602 = vmatpush.msra.mxu0 %v301
    %603 = vmatpush.msra.mxu0 %v297
    %604 = vmatpush.msra.mxu0 %v293
    %605 = vmatpush.msra.mxu0 %v289
    %606 = vmatpush.msra.mxu0 %v285
    %607 = vmatpush.msra.mxu0 %v281
    %608 = vmatpush.msra.mxu0 %v277
    %609 = vmatpush.msra.mxu0 %v273
    %610 = vmatpush.msra.mxu0 %v269
    %611 = vmatpush.msra.mxu0 %v265
    %612 = vmatpush.msra.mxu0 %v261
    %613 = vmatpush.msra.mxu0 %v257
    %614 = vmatpush.msra.mxu0 %v253
    %615 = vmatpush.msra.mxu0 %v249
    %616 = vmatpush.msra.mxu0 %v245
    %617 = vmatpush.msra.mxu0 %v241
    %618 = vmatmul.f32.gmra.mxu0 %v45
    %v619 = vpop.f32.mrf.mxu0
    %v620 = vadd.f32 %v600, %v619
    %621 = vdwg.mxu0
    %622 = vst [vmem:[#allocation7] sm:$0xff] %v380
    %623 = vst [vmem:[#allocation7 + $0x8] sm:$0xff] %v460
    %624 = vst [vmem:[#allocation7 + $0x10] sm:$0xff] %v540
    %625 = vst [vmem:[#allocation7 + $0x18] sm:$0xff] %v620
    // Predicated region
    $region18: #{tpu_custom_call.1} parent=1 // pred_check
      _
    $region19: #{tpu_custom_call.1} parent=1 // pred_check_branch
      %627 = sbr.rel (0) target = $region21
    $region20: #{tpu_custom_call.1} parent=1 // pred_region
      %629 = vsyncadd [#allocation4], 0
      %s631 = sshll.u32 [#allocation7], 4
      %s632 = int_to_ptr.vmem [resolvable:$true] %s631
      %s633 = sshll.u32 %s2, 4
      %s634 = int_to_ptr.hbm [resolvable:$true] %s633
      %636 = dma.vmem_to_hbm [thread:$0]  %s632, 512, %s634, [#allocation4]
    $region21: #{tpu_custom_call.1} parent=1 // pred_fallthru
      _
    // Predicated region
    $region22: #{tpu_custom_call.1} parent=1 // pred_check
      _
    $region23: #{tpu_custom_call.1} parent=1 // pred_check_branch
      %638 = sbr.rel (0) target = $region25
    $region24: #{tpu_custom_call.1} parent=1 // pred_region
      %640 = dma.done [#allocation4], 512
    $region25: #{tpu_custom_call.1} parent=1 // pred_fallthru
      _
    %641 = vsyncpa [#allocation3], 1
    %642 = vsyncpa [#allocation6], 1
    %643 = vsyncpa [#allocation4], 1

</llo_original>
